<compile_context>
chip_gen: v6e
topology: v6e:2x2x1
jax: 0.10.0
libtpu: 0.0.40
codegen_flags: <defaults>
</compile_context>

<pallas_src>
import jax
import jax.numpy as jnp
from jax import lax
from jax.experimental import pallas as pl
from jax.experimental.pallas import tpu as pltpu


def _round_up(x, m):
    return ((x + m - 1) // m) * m


# ----------------------------------------------------------------------------
# Pallas kernel 1: weighted softmax cross-entropy  (F.cross_entropy w/ weight)
# Layout: rows = B*Q (padded to x8, sublanes), classes padded to 128 (lanes).
# Per-row weight w[target] is gathered in the wrapper; no one-hot in-kernel.
# ----------------------------------------------------------------------------
def _weighted_ce_kernel(logits_ref, tgt_ref, wt_ref, out_ref):
    x = logits_ref[...].astype(jnp.float32)            # (Npad, Cpad)
    tgt = tgt_ref[...]                                  # (Npad, 1) int32
    w = wt_ref[...]                                     # (Npad, 1) f32 (0 for pad rows)
    n, c = x.shape

    class_ids = lax.broadcasted_iota(jnp.int32, (n, c), 1)
    m = jnp.max(x, axis=-1, keepdims=True)
    lse = m + jnp.log(jnp.sum(jnp.exp(x - m), axis=-1, keepdims=True))      # (Npad,1)
    tgt_logit = jnp.sum(jnp.where(class_ids == tgt, x, 0.0),
                        axis=-1, keepdims=True)                              # (Npad,1)
    loss = w * (lse - tgt_logit)

    # PyTorch cross_entropy(weight=..., reduction='mean') = sum(w*l) / sum(w)
    out_ref[0, 0] = jnp.sum(loss)
    out_ref[0, 1] = jnp.sum(w)


def weighted_cross_entropy(logits, targets, class_weights):
    B, Q, C = logits.shape
    N = B * Q
    Npad = _round_up(N, 8)
    Cpad = _round_up(C, 128)

    x = logits.reshape(N, C)
    # Pad classes to a full 128-lane tile (and rows to x8). Padding value is a
    # large negative so padded classes contribute 0 to logsumexp.
    x = jnp.pad(x, ((0, Npad - N), (0, Cpad - C)),
                constant_values=jnp.asarray(-1e9, logits.dtype))

    tgt = targets.reshape(N).astype(jnp.int32)
    wt = class_weights.astype(jnp.float32)[tgt]          # plain-JAX weight gather
    tgt = jnp.pad(tgt, (0, Npad - N))[:, None]           # (Npad, 1)
    wt = jnp.pad(wt, (0, Npad - N))[:, None]             # (Npad, 1), pad weight = 0

    sums = pl.pallas_call(
        _weighted_ce_kernel,
        out_shape=jax.ShapeDtypeStruct((1, 2), jnp.float32),
        in_specs=[
            pl.BlockSpec(memory_space=pltpu.VMEM),
            pl.BlockSpec(memory_space=pltpu.VMEM),
            pl.BlockSpec(memory_space=pltpu.VMEM),
        ],
        out_specs=pl.BlockSpec(memory_space=pltpu.SMEM),
    )(x, tgt, wt)
    return sums[0, 0] / sums[0, 1]


# ----------------------------------------------------------------------------
# Pallas kernel 2: tiled sigmoid_ce_loss + dice_loss partial sums.
# Inputs streamed in their native (bf16) dtype; cast to f32 after load.
# Outputs are lane-dense (Mpad, 128) per-row partial sums; finalisation of the
# scalar losses is done in the JAX wrapper.
# ----------------------------------------------------------------------------
def _mask_loss_kernel(logits_ref, labels_ref, bce_ref, py_ref, ps_ref, ys_ref):
    j = pl.program_id(1)           # P (reduction) axis — last, "arbitrary"

    @pl.when(j == 0)
    def _init():
        bce_ref[...] = jnp.zeros_like(bce_ref)
        py_ref[...] = jnp.zeros_like(py_ref)
        ps_ref[...] = jnp.zeros_like(ps_ref)
        ys_ref[...] = jnp.zeros_like(ys_ref)

    x = logits_ref[...].astype(jnp.float32)     # (TM, TP)
    y = labels_ref[...].astype(jnp.float32)     # (TM, TP)

    # One shared exp(-|x|) feeds both the stable BCE softplus and the sigmoid.
    e = jnp.exp(-jnp.abs(x))
    bce = jnp.maximum(x, 0.0) - x * y + jnp.log1p(e)
    inv = pl.reciprocal(1.0 + e, approx=True)            # EUP slot, near-free
    p = jnp.where(x >= 0.0, inv, e * inv)                # sigmoid(x)

    def lane_fold(v):
        # (TM, TP) -> (TM, 128): fold 128-wide lane groups with static slices
        # (pure VPU adds; no XLU full-lane reduce, no layout-changing reshape).
        acc = v[:, 0:128]
        for g in range(1, v.shape[1] // 128):
            acc = acc + v[:, g * 128:(g + 1) * 128]
        return acc

    bce_ref[...] += lane_fold(bce)
    py_ref[...] += lane_fold(p * y)
    ps_ref[...] += lane_fold(p)
    ys_ref[...] += lane_fold(y)


def mask_losses(point_logits, point_labels, num_masks):
    """point_logits/point_labels: (M, P) in any float dtype (bf16 preferred)."""
    M, P = point_logits.shape

    # ---- tile sizing (multiples of (8, 128); sized for v5e/v6e/v7x VMEM) ----
    M1 = max(M, 1)
    TM = min(128, _round_up(M1, 8))
    Mpad = _round_up(M1, TM)
    P128 = _round_up(P, 128)
    TP = P128 if P128 <= 4096 else 2048
    Ppad = _round_up(P, TP)

    # Pad: logits with a large negative (sigmoid->0, softplus->0), labels with 0
    # so padded P-columns contribute exactly 0 to every partial sum.  Padded
    # M-rows are sliced away in the finalisation below.
    neg = jnp.asarray(-1e4, point_logits.dtype)
    x = jnp.pad(point_logits, ((0, Mpad - M), (0, Ppad - P)), constant_values=neg)
    y = jnp.pad(point_labels, ((0, Mpad - M), (0, Ppad - P)))

    grid = (Mpad // TM, Ppad // TP)
    out_shape = tuple(jax.ShapeDtypeStruct((Mpad, 128), jnp.float32) for _ in range(4))
    out_specs = tuple(pl.BlockSpec((TM, 128), lambda i, j: (i, 0)) for _ in range(4))

    bce_p, py_p, ps_p, ys_p = pl.pallas_call(
        _mask_loss_kernel,
        grid=grid,
        in_specs=[
            pl.BlockSpec((TM, TP), lambda i, j: (i, j)),
            pl.BlockSpec((TM, TP), lambda i, j: (i, j)),
        ],
        out_specs=out_specs,
        out_shape=out_shape,
        compiler_params=pltpu.CompilerParams(
            dimension_semantics=("parallel", "arbitrary"),
            vmem_limit_bytes=32 * 1024 * 1024,
        ),
    )(x, y)

    # ---- finalisation (tiny, plain JAX) ----
    bce_rows = jnp.sum(bce_p[:M], axis=-1)     # (M,)
    py_rows = jnp.sum(py_p[:M], axis=-1)
    p_rows = jnp.sum(ps_p[:M], axis=-1)
    y_rows = jnp.sum(ys_p[:M], axis=-1)

    loss_mask = jnp.sum(bce_rows) / (float(P) * num_masks)
    dice = 1.0 - (2.0 * py_rows + 1.0) / (p_rows + y_rows + 1.0)
    loss_dice = jnp.sum(dice) / num_masks
    return loss_mask, loss_dice


# ----------------------------------------------------------------------------
# SetCriterion wrapper (glue in plain JAX)
# ----------------------------------------------------------------------------
class SetCriterionPallas:
    """losses = ['labels', 'masks'], learn_coco_clipcls_class=False,
    use_bce2CLIP=False, ce_v2l=False, use_weight_mask=False."""

    def __init__(self, num_classes, eos_coef, num_queries):
        self.num_classes = num_classes
        self.eos_coef = eos_coef
        self.num_queries = num_queries
        # buffers from __init__ of the PyTorch module
        self.empty_weight = jnp.ones(num_classes + 1, jnp.float32).at[-1].set(eos_coef)
        self.additional_weight = jnp.ones(1, jnp.float32)

    def matcher(self, outputs, targets):
        # TODO(synk): Hungarian matcher is external to this module; use deterministic
        # identity matching (query i <-> target i) instead.
        return [(jnp.arange(len(t['labels']), dtype=jnp.int32),
                 jnp.arange(len(t['labels']), dtype=jnp.int32)) for t in targets]

    def forward(self, outputs, targets):
        indices = self.matcher(outputs, targets)
        # TODO(synk): distributed all_reduce of num_masks skipped (world_size=1).
        num_masks = float(max(sum(len(t['labels']) for t in targets), 1))

        # ---- loss_labels (non-clipcls branch) ----
        src_logits = outputs['pred_logits'].astype(jnp.float32)  # .float() in spec
        bz, nq, C = src_logits.shape
        batch_idx = jnp.concatenate(
            [jnp.full_like(src, i) for i, (src, _) in enumerate(indices)])
        src_idx = jnp.concatenate([src for src, _ in indices])
        target_classes = jnp.full((bz, nq), self.num_classes + bz, dtype=jnp.int32)
        target_classes = target_classes.at[batch_idx, src_idx].set(
            batch_idx.astype(jnp.int32))
        empty_weight_full = jnp.concatenate(
            [jnp.tile(self.additional_weight, bz), self.empty_weight])
        loss_ce = weighted_cross_entropy(src_logits, target_classes, empty_weight_full)

        # ---- loss_masks ----
        tgt_batch_idx = jnp.concatenate(
            [jnp.full_like(tgt, i) for i, (_, tgt) in enumerate(indices)])
        tgt_idx = jnp.concatenate([tgt for _, tgt in indices])

        # No f32 up-cast here: stream masks in their native (bf16) dtype.
        src_masks = outputs['pred_masks'][batch_idx, src_idx]          # (M, H, W)
        max_nt = max(t['masks'].shape[0] for t in targets)
        H, W = targets[0]['masks'].shape[-2:]
        padded_tgt = jnp.stack([
            jnp.pad(t['masks'], ((0, max_nt - t['masks'].shape[0]), (0, 0), (0, 0)))
            for t in targets])                                         # (B, max_nt, H, W)
        tgt_masks = padded_tgt[tgt_batch_idx, tgt_idx]                 # (M, H, W)

        M = src_masks.shape[0]
        # TODO(synk): get_uncertain_point_coords_with_randomness / point_sample
        # (random bilinear point sampling) replaced by dense evaluation on all H*W points.
        point_logits = src_masks.reshape(M, H * W)
        point_labels = tgt_masks.reshape(M, H * W)
        loss_mask, loss_dice = mask_losses(point_logits, point_labels, num_masks)

        return {'loss_ce': loss_ce, 'loss_mask': loss_mask, 'loss_dice': loss_dice}


# ----------------------------------------------------------------------------
# Pure-JAX reference for validation
# ----------------------------------------------------------------------------
def _reference(outputs, targets, criterion):
    indices = criterion.matcher(outputs, targets)
    num_masks = float(max(sum(len(t['labels']) for t in targets), 1))

    src_logits = outputs['pred_logits'].astype(jnp.float32)
    bz, nq, C = src_logits.shape
    batch_idx = jnp.concatenate([jnp.full_like(s, i) for i, (s, _) in enumerate(indices)])
    src_idx = jnp.concatenate([s for s, _ in indices])
    tc = jnp.full((bz, nq), criterion.num_classes + bz, dtype=jnp.int32)
    tc = tc.at[batch_idx, src_idx].set(batch_idx.astype(jnp.int32))
    w = jnp.concatenate([jnp.tile(criterion.additional_weight, bz), criterion.empty_weight])
    logp = jax.nn.log_softmax(src_logits, axis=-1)
    nll = -jnp.take_along_axis(logp, tc[:, :, None], axis=-1)[..., 0]
    wt = w[tc]
    loss_ce = jnp.sum(wt * nll) / jnp.sum(wt)

    src_masks = outputs['pred_masks'][batch_idx, src_idx].astype(jnp.float32)
    tgt_masks = jnp.concatenate([t['masks'].astype(jnp.float32) for t in targets])
    x = src_masks.reshape(src_masks.shape[0], -1)
    y = tgt_masks.reshape(tgt_masks.shape[0], -1)
    bce = jnp.maximum(x, 0.0) - x * y + jnp.log1p(jnp.exp(-jnp.abs(x)))
    loss_mask = jnp.sum(jnp.mean(bce, axis=1)) / num_masks
    p = jax.nn.sigmoid(x)
    numer = 2.0 * jnp.sum(p * y, axis=1)
    denom = jnp.sum(p, axis=1) + jnp.sum(y, axis=1)
    loss_dice = jnp.sum(1.0 - (numer + 1.0) / (denom + 1.0)) / num_masks
    return {'loss_ce': loss_ce, 'loss_mask': loss_mask, 'loss_dice': loss_dice}


if __name__ == "__main__":
    key = jax.random.PRNGKey(0)
    B, Q, num_classes, H, W = 2, 8, 4, 16, 16
    nt = 3                                   # targets per image
    C = B + num_classes + 1                  # ref classes + coco classes + no-object

    k1, k2, k3, _ = jax.random.split(key, 4)
    pred_logits = jax.random.normal(k1, (B, Q, C), jnp.float32)
    # Masks kept in bf16: the mask-loss kernel streams them as-is (no f32 copy).
    pred_masks = jax.random.normal(k2, (B, Q, H, W), jnp.bfloat16)
    outputs = {'pred_logits': pred_logits, 'pred_masks': pred_masks}

    targets = []
    for b in range(B):
        kb1, kb2 = jax.random.split(jax.random.fold_in(k3, b))
        labels = jax.random.randint(kb1, (nt,), 0, num_classes, jnp.int32)
        masks = (jax.random.uniform(kb2, (nt, H, W)) > 0.5).astype(jnp.bfloat16)
        targets.append({'labels': labels, 'masks': masks, 'empty': jnp.zeros(())})

    criterion = SetCriterionPallas(num_classes=num_classes, eos_coef=0.1, num_queries=Q)
    losses = criterion.forward(outputs, targets)
    losses = jax.tree_util.tree_map(jax.block_until_ready, losses)

    ref = _reference(outputs, targets, criterion)
    for k in losses:
        a, r = float(losses[k]), float(ref[k])
        assert abs(a - r) < 2e-3 * max(1.0, abs(r)), (k, a, r)

    print("KERNEL_OK")
</pallas_src>

<mosaic_0001>
module attributes {stable_mosaic.version = 11 : i64} {
  func.func @_weighted_ce_kernel(%arg0: memref<16x128xf32, #tpu.memory_space<vmem>>, %arg1: memref<16x1xi32, #tpu.memory_space<vmem>>, %arg2: memref<16x1xf32, #tpu.memory_space<vmem>>, %arg3: memref<1x2xf32, #tpu.memory_space<smem>>) attributes {dimension_semantics = [], scalar_prefetch = 0 : i64, scratch_operands = 0 : i64, tpu.core_type = #tpu.core_type<tc>} {
    %c0 = arith.constant 0 : index
    %c0_0 = arith.constant 0 : index
    %0 = vector.load %arg0[%c0, %c0_0] : memref<16x128xf32, #tpu.memory_space<vmem>>, vector<16x128xf32>
    %c0_1 = arith.constant 0 : index
    %c0_2 = arith.constant 0 : index
    %1 = vector.load %arg1[%c0_1, %c0_2] : memref<16x1xi32, #tpu.memory_space<vmem>>, vector<16x1xi32>
    %c0_3 = arith.constant 0 : index
    %c0_4 = arith.constant 0 : index
    %2 = vector.load %arg2[%c0_3, %c0_4] : memref<16x1xf32, #tpu.memory_space<vmem>>, vector<16x1xf32>
    %3 = tpu.iota {dimensions = array<i32: 1>} : vector<16x128xi32>
    %cst = arith.constant dense<0xFF800000> : vector<16xf32>
    %4 = vector.multi_reduction <maximumf>, %0, %cst [1] : vector<16x128xf32> to vector<16xf32>
    %5 = vector.shape_cast %4 : vector<16xf32> to vector<16x1xf32>
    %6 = vector.broadcast %5 : vector<16x1xf32> to vector<16x128xf32>
    %7 = arith.subf %0, %6 : vector<16x128xf32>
    %8 = math.exp %7 : vector<16x128xf32>
    %cst_5 = arith.constant dense<0.000000e+00> : vector<16xf32>
    %9 = vector.multi_reduction <add>, %8, %cst_5 [1] : vector<16x128xf32> to vector<16xf32>
    %10 = vector.shape_cast %9 : vector<16xf32> to vector<16x1xf32>
    %11 = math.log %10 : vector<16x1xf32>
    %12 = arith.addf %5, %11 : vector<16x1xf32>
    %13 = vector.broadcast %1 : vector<16x1xi32> to vector<16x128xi32>
    %14 = arith.cmpi eq, %3, %13 : vector<16x128xi32>
    %cst_6 = arith.constant 0.000000e+00 : f32
    %15 = vector.broadcast %cst_6 : f32 to vector<16x128xf32>
    %16 = arith.select %14, %0, %15 : vector<16x128xi1>, vector<16x128xf32>
    %cst_7 = arith.constant dense<0.000000e+00> : vector<16xf32>
    %17 = vector.multi_reduction <add>, %16, %cst_7 [1] : vector<16x128xf32> to vector<16xf32>
    %18 = vector.shape_cast %17 : vector<16xf32> to vector<16x1xf32>
    %19 = arith.subf %12, %18 : vector<16x1xf32>
    %20 = arith.mulf %2, %19 : vector<16x1xf32>
    %21 = vector.shape_cast %20 : vector<16x1xf32> to vector<1x16x1xf32>
    %cst_8 = arith.constant dense<0.000000e+00> : vector<1xf32>
    %22 = vector.multi_reduction <add>, %21, %cst_8 [1, 2] : vector<1x16x1xf32> to vector<1xf32>
    %23 = vector.shape_cast %22 : vector<1xf32> to vector<1x1x1xf32>
    %24 = vector.extract %23[0, 0, 0] : f32 from vector<1x1x1xf32>
    %c0_9 = arith.constant 0 : index
    %c0_10 = arith.constant 0 : index
    %25 = memref.load %arg3[%c0_9, %c0_10] : memref<1x2xf32, #tpu.memory_space<smem>>
    memref.store %24, %arg3[%c0_9, %c0_10] : memref<1x2xf32, #tpu.memory_space<smem>>
    %26 = vector.shape_cast %2 : vector<16x1xf32> to vector<1x16x1xf32>
    %cst_11 = arith.constant dense<0.000000e+00> : vector<1xf32>
    %27 = vector.multi_reduction <add>, %26, %cst_11 [1, 2] : vector<1x16x1xf32> to vector<1xf32>
    %28 = vector.shape_cast %27 : vector<1xf32> to vector<1x1x1xf32>
    %29 = vector.extract %28[0, 0, 0] : f32 from vector<1x1x1xf32>
    %c0_12 = arith.constant 0 : index
    %c1 = arith.constant 1 : index
    %30 = memref.load %arg3[%c0_12, %c1] : memref<1x2xf32, #tpu.memory_space<smem>>
    memref.store %29, %arg3[%c0_12, %c1] : memref<1x2xf32, #tpu.memory_space<smem>>
    return
  }
}

</mosaic_0001>

<llo_original>
// kernel: tpu_custom_call.1
$region0: #{tpu_custom_call.1}
  #allocation0 [shape = 'u32[]', space=smem, size = 0x4, offset = 0x4, fixed_abs, tag = 'smem constant byte address 0x4 - core index']
  #allocation1 [shape = 'u32[144,128]{1,0:T(1,128)}', space=vmem, size = 0x12000, scoped, tag = 'internal scratch']
  %s0 = inlined_call_operand.vmem [shape: f32[16,128], index: 0, kind: input, shape index: {}]
  %s1 = inlined_call_operand.vmem [shape: s32[16,1], index: 1, kind: input, shape index: {}]
  %s2 = inlined_call_operand.vmem [shape: f32[16,1], index: 2, kind: input, shape index: {}]
  %s3 = inlined_call_operand.hbm [shape: f32[1,2], index: 3, kind: output, shape index: {}]
  %s4 = sld [smem:[#allocation0]]
  $region22: #{tpu_custom_call.1} parent=0
    _
  %s6 = ssub.s32 1, %s4
  %s7 = scalar_select 0, %s6, %s4
  $region1: #{tpu_custom_call.1} parent=0
    #allocation2 [shape = 'u8[512]{0}', space=smem, size = 0x200, scoped, tag = 'output window, operand 0, single buffered']
    #allocation3 [shape = 's32[1]{0}', space=sflag, size = 0x4, scoped, tag = 'scoped memory for tpu_custom_call.1']
    %8 = vsyncpa [#allocation3], 0
    // Predicated region
    $region2: #{tpu_custom_call.1} parent=1 // pred_check
      _
    $region3: #{tpu_custom_call.1} parent=1 // pred_check_branch
      %10 = sbr.rel (0) target = $region5
    $region4: #{tpu_custom_call.1} parent=1 // pred_region
      _
    $region5: #{tpu_custom_call.1} parent=1 // pred_fallthru
      _
    // Predicated region
    $region6: #{tpu_custom_call.1} parent=1 // pred_check
      _
    $region7: #{tpu_custom_call.1} parent=1 // pred_check_branch
      %12 = sbr.rel (0) target = $region9
    $region8: #{tpu_custom_call.1} parent=1 // pred_region
      _
    $region9: #{tpu_custom_call.1} parent=1 // pred_fallthru
      _
    // Predicated region
    $region10: #{tpu_custom_call.1} parent=1 // pred_check
      _
    $region11: #{tpu_custom_call.1} parent=1 // pred_check_branch
      %14 = sbr.rel (0) target = $region13
    $region12: #{tpu_custom_call.1} parent=1 // pred_region
      _
    $region13: #{tpu_custom_call.1} parent=1 // pred_fallthru
      _
    %v15 = vld [vmem:[%s0] sm:$0xff]
    %v16 = vld [vmem:[%s0 + $0x8] sm:$0xff]
    %v17 = vld [vmem:[%s1] sm:$0xff]
    %v18 = vld [vmem:[%s1 + $0x8] sm:$0xff]
    %v19 = vld [vmem:[%s2] sm:$0xff]
    %v20 = vld [vmem:[%s2 + $0x8] sm:$0xff]
    %v21 = vlaneseq
    %v22 = vand.u32 %v21, 127
    %23 = vmax.xlane.f32.xlu0 %v15
    %v24 = vpop.xlane.xlu0 %23
    %25 = vmax.xlane.f32.xlu0 %v16
    %v26 = vpop.xlane.xlu0 %25
    %v27 = vsub.f32 %v15, %v24
    %v28 = vsub.f32 %v16, %v26
    %v29 = vmul.f32 %v27, 1.442695
    %v30 = vpow.pop %v29
    %v31 = vmul.f32 %v28, 1.442695
    %v32 = vpow.pop %v31
    %33 = vadd.xlane.f32.xlu0 %v30
    %v34 = vpop.xlane.xlu0 %33
    %35 = vadd.xlane.f32.xlu0 %v32
    %v36 = vpop.xlane.xlu0 %35
    %v37 = vlog2.pop %v34
    %v38 = vmul.f32 %v37, 0.6931472
    %v39 = vlog2.pop %v36
    %v40 = vmul.f32 %v39, 0.6931472
    %v41 = vadd.f32 %v24, %v38
    %v42 = vadd.f32 %v26, %v40
    %43 = vset.pattern.permute.xlu0 0
    %44 = vperm.xlu0 %43, %v17
    %v45 = vpop.permute.xlu0 %44
    %46 = vset.pattern.permute.xlu0 0
    %47 = vperm.xlu0 %46, %v18
    %v48 = vpop.permute.xlu0 %47
    %vm49 = vcmp.eq.s32.totalorder %v22, %v45
    %vm50 = vcmp.eq.s32.totalorder %v22, %v48
    %v51 = vsel %vm49, %v15, 0.0
    %v52 = vsel %vm50, %v16, 0.0
    %53 = vadd.xlane.f32.xlu0 %v51
    %v54 = vpop.xlane.xlu0 %53
    %55 = vadd.xlane.f32.xlu0 %v52
    %v56 = vpop.xlane.xlu0 %55
    %v57 = vsub.f32 %v41, %v54
    %v58 = vsub.f32 %v42, %v56
    %v59 = vmul.f32 %v19, %v57
    %v60 = vmul.f32 %v20, %v58
    %vm61 = vcmask 7168
    %v62 = vsel %vm61, %v59, 0.0
    %v63 = vsel %vm61, %v60, 0.0
    %v64 = vadd.f32 %v62, %v63
    %65 = vadd.xlane.f32.xlu0 %v64
    %v66 = vpop.xlane.xlu0 %65
    %v67 = vrot.slane %v66, 4
    %v68 = vadd.f32 %v66, %v67
    %v69 = vrot.slane %v68, 2
    %v70 = vadd.f32 %v68, %v69
    %v71 = vrot.slane %v70, 1
    %v72 = vadd.f32 %v70, %v71
    %s73 = vtos %v72
    %s74 = scalar_lea.smem [#allocation2], 0
    %75 = sst [smem:[%s74]] %s73
    %v76 = vsel %vm61, %v19, 0.0
    %v77 = vsel %vm61, %v20, 0.0
    %v78 = vadd.f32 %v76, %v77
    %79 = vadd.xlane.f32.xlu0 %v78
    %v80 = vpop.xlane.xlu0 %79
    %v81 = vrot.slane %v80, 4
    %v82 = vadd.f32 %v80, %v81
    %v83 = vrot.slane %v82, 2
    %v84 = vadd.f32 %v82, %v83
    %v85 = vrot.slane %v84, 1
    %v86 = vadd.f32 %v84, %v85
    %s87 = vtos %v86
    %s88 = scalar_lea.smem [#allocation2], 1
    %89 = sst [smem:[%s88]] %s87
    // Predicated region
    $region14: #{tpu_custom_call.1} parent=1 // pred_check
      _
    $region15: #{tpu_custom_call.1} parent=1 // pred_check_branch
      %91 = sbr.rel (0) target = $region17
    $region16: #{tpu_custom_call.1} parent=1 // pred_region
      %s93 = ssub.s32 16, 16
      %94 = vsyncadd [#allocation3], %s93
      %97 = dma.smem_to_hbm [#allocation2], 16, %s3, [#allocation3]
    $region17: #{tpu_custom_call.1} parent=1 // pred_fallthru
      _
    // Predicated region
    $region18: #{tpu_custom_call.1} parent=1 // pred_check
      _
    $region19: #{tpu_custom_call.1} parent=1 // pred_check_branch
      %99 = sbr.rel (0) target = $region21
    $region20: #{tpu_custom_call.1} parent=1 // pred_region
      %100 = dma.done [#allocation3], 16
    $region21: #{tpu_custom_call.1} parent=1 // pred_fallthru
      _
    %101 = sfence
    %102 = vsyncpa [#allocation3], 1

</llo_original>
